<compile_context>
chip_gen: v7x
topology: tpu7x:2x2x1
jax: 0.10.0
libtpu: 0.0.40
codegen_flags: <defaults>
</compile_context>

<pallas_src>
import jax
import jax.numpy as jnp
from jax.experimental import pallas as pl
from jax.experimental.pallas import tpu as pltpu


# ---------------------------------------------------------------------------
# VMEM budgeting (generation aware: v5e/v6e = 128 MiB, v7x = 64 MiB)
# ---------------------------------------------------------------------------
def _tpu_vmem_capacity_bytes():
    try:
        info = pltpu.get_tpu_info()
        cap = getattr(info, "vmem_capacity_bytes", None)
        if cap:
            return int(cap)
    except Exception:
        pass
    return 64 * 1024 * 1024          # conservative default (v7x)


_VMEM_LIMIT = int(min(100 * 2 ** 20, int(_tpu_vmem_capacity_bytes() * 0.8)))

_PAD = 3                             # halo of the largest (7x7) filter


def _round_up(x, m):
    return -(-x // m) * m


# ---------------------------------------------------------------------------
# tile-size heuristics (VMEM-budgeted)
# ---------------------------------------------------------------------------
def _pick_tile_m(M, cols_in, cols_out, itemsize, tile_m=None):
    """Row tile for the fused pointwise stem: block (TILE_M, channels)."""
    if tile_m is not None:
        assert tile_m % 8 == 0, tile_m
        return tile_m
    per_row = 2 * (cols_in + cols_out) * itemsize        # double-buffered in+out
    cap = (_VMEM_LIMIT // 2) // per_row
    cap = max(512, min(8192, (cap // 8) * 8))            # 512..8192 rows
    if M <= cap:
        return _round_up(max(M, 8), 8)                   # single block
    return cap


def _pick_tile_h(H, W, C, act_itemsize, weight_bytes, tile_h=None):
    """Row-band height for the pyramid kernel, incl. the folded-patch temps."""
    C4 = 4 * C

    def band_bytes(th):
        rows = th + 2 * _PAD
        slab = 3 * rows * W * C4 * act_itemsize                    # 2 slots + masked copy
        xw = sum((th + k - 1) * W * k * C for k in (3, 5, 7)) * act_itemsize
        epi = (3 * C * 4 + C4 * act_itemsize + C4 * 4) * th * W    # y1..y3, cat, conv5
        outb = 2 * th * W * C4 * 4                                 # out block, dbl-buffered
        return slab + xw + epi + outb

    if tile_h is not None:
        assert H % tile_h == 0, (H, tile_h)
        assert tile_h == H or tile_h >= _PAD, tile_h
        assert tile_h == H or (tile_h * W) % 8 == 0, (tile_h, W)
        return tile_h

    budget = max(_VMEM_LIMIT - weight_bytes - (4 << 20), 2 << 20)
    ok = [t for t in range(1, H + 1)
          if H % t == 0 and (t == H or (t >= _PAD and (t * W) % 8 == 0))]
    fits = [t for t in ok if band_bytes(t) <= budget]
    return max(fits) if fits else min(ok)


# ---------------------------------------------------------------------------
# Kernel 1: all four branch 1x1 convs fused into one matmul + bias + ReLU
# ---------------------------------------------------------------------------
def _stem_kernel(x_ref, w_ref, b_ref, o_ref):
    # x_ref: (TILE_M, Cin)  w_ref: (Cin, 4C)  b_ref: (1, 4C) f32  o_ref: (TILE_M, 4C)
    y = jnp.dot(x_ref[...], w_ref[...], preferred_element_type=jnp.float32)
    y = jnp.maximum(y + b_ref[...], 0.0)
    o_ref[...] = y.astype(o_ref.dtype)                   # single lane-dense store


def fused_pointwise_stem(x_nhwc, w_all, b_all, compute_dtype, tile_m=None):
    """All four 1x1 branch convs (+bias+ReLU) -> one (N, H, W, 4C) tensor."""
    N, H, W, Cin = x_nhwc.shape
    C4 = w_all.shape[1]
    M = N * H * W
    itemsize = jnp.dtype(compute_dtype).itemsize
    tm = _pick_tile_m(M, Cin, C4, itemsize, tile_m)
    Mp = _round_up(M, tm)

    x_flat = x_nhwc.reshape(M, Cin).astype(compute_dtype)
    if Mp != M:                                          # ragged-M tail padding
        x_flat = jnp.pad(x_flat, ((0, Mp - M), (0, 0)))

    out = pl.pallas_call(
        _stem_kernel,
        out_shape=jax.ShapeDtypeStruct((Mp, C4), compute_dtype),
        grid=(Mp // tm,),
        in_specs=[pl.BlockSpec((tm, Cin), lambda i: (i, 0)),
                  pl.BlockSpec((Cin, C4), lambda i: (0, 0)),
                  pl.BlockSpec((1, C4), lambda i: (0, 0))],
        out_specs=pl.BlockSpec((tm, C4), lambda i: (i, 0)),
        compiler_params=pltpu.CompilerParams(
            dimension_semantics=("parallel",),
            vmem_limit_bytes=_VMEM_LIMIT),
    )(x_flat, w_all.astype(compute_dtype),
      b_all.reshape(1, C4).astype(jnp.float32))
    if Mp != M:
        out = out[:M]
    return out.reshape(N, H, W, C4)


# ---------------------------------------------------------------------------
# Kernel 2: 3x3/5x5/7x7 convs + x4 pass-through + concat + conv5(1x1) + ReLU,
#           row-band grid, manual double-buffered halo DMA, in-kernel zero halo
# ---------------------------------------------------------------------------
def _make_pyramid_kernel(H, W, C, TILE_H, nb, steps_per):
    C4 = 4 * C
    ROWS = TILE_H + 2 * _PAD

    def kernel(y_hbm, w3_ref, w5_ref, w7_ref, bk_ref, wc5_ref, b5_ref,
               o_ref, buf, sem):
        # y_hbm : (N, H, W, 4C) stem output, UNPADDED, stays in HBM (pl.ANY)
        # w*_ref: (K, K*C, C)   width-folded branch weights
        # bk_ref: (3, 1, C) f32 branch biases; wc5_ref: (4C, 4C); b5_ref: (1, 4C)
        # o_ref : (1, TILE_H*W, 4C) final (conv5) output block
        # buf   : VMEM (2*ROWS, W, 4C) manual double buffer (slot-major rows)
        # sem   : DMA semaphores (3 regions, 2 slots)
        t = pl.program_id(1)
        flat = pl.program_id(0) * steps_per + t
        band = flat % nb
        slot = t % 2

        def band_copies(f, sl):
            n_i = f // nb
            b_i = f % nb
            base = sl * ROWS
            # Three static-size row windows.  Edge bands read clamped
            # (in-bounds) garbage rows that the halo row-mask zeroes below,
            # so no jnp.pad'ed copy of the activation is ever made in HBM.
            top = jnp.clip(b_i * TILE_H - _PAD, 0, H - _PAD)
            mid = b_i * TILE_H
            bot = jnp.clip(mid + TILE_H, 0, H - _PAD)
            return (
                pltpu.make_async_copy(y_hbm.at[n_i, pl.ds(top, _PAD)],
                                      buf.at[pl.ds(base, _PAD)],
                                      sem.at[0, sl]),
                pltpu.make_async_copy(y_hbm.at[n_i, pl.ds(mid, TILE_H)],
                                      buf.at[pl.ds(base + _PAD, TILE_H)],
                                      sem.at[1, sl]),
                pltpu.make_async_copy(y_hbm.at[n_i, pl.ds(bot, _PAD)],
                                      buf.at[pl.ds(base + _PAD + TILE_H, _PAD)],
                                      sem.at[2, sl]),
            )

        @pl.when(t == 0)                       # prime this core-chunk's first band
        def _():
            for cp in band_copies(flat, slot):
                cp.start()

        @pl.when(t + 1 < steps_per)            # prefetch next band (incl. next image)
        def _():
            for cp in band_copies(flat + 1, 1 - slot):
                cp.start()

        for cp in band_copies(flat, slot):     # wait for this band's slab
            cp.wait()

        slab = buf[pl.ds(slot * ROWS, ROWS)]                  # (ROWS, W, 4C)
        # zero-fill out-of-image halo rows of edge bands (in-kernel, no HBM pad)
        row = (jax.lax.broadcasted_iota(jnp.int32, (ROWS, 1, 1), 0)
               + (band * TILE_H - _PAD))
        slab = jnp.where(jnp.logical_and(row >= 0, row < H), slab,
                         jnp.zeros_like(slab))

        def conv_branch(j, K, w_ref):
            pad = (K - 1) // 2
            off = _PAD - pad
            rows_j = TILE_H + K - 1
            ch = slab[off:off + rows_j, :, j * C:(j + 1) * C]     # (rows_j, W, C)
            zc = jnp.zeros((rows_j, pad, C), ch.dtype)            # width halo in-value
            chp = jnp.concatenate([zc, ch, zc], axis=1)           # (rows_j, W+K-1, C)
            # hoisted width-tap fold: K slices total instead of K*K
            xw = jnp.concatenate([chp[:, dj:dj + W, :] for dj in range(K)],
                                 axis=-1)                         # (rows_j, W, K*C)
            acc = jnp.dot(xw[0:TILE_H].reshape(TILE_H * W, K * C), w_ref[0],
                          preferred_element_type=jnp.float32)
            for di in range(1, K):                                # local accumulation
                acc = acc + jnp.dot(
                    xw[di:di + TILE_H].reshape(TILE_H * W, K * C), w_ref[di],
                    preferred_element_type=jnp.float32)
            return jnp.maximum(acc + bk_ref[j].astype(jnp.float32), 0.0)

        y1 = conv_branch(0, 3, w3_ref)
        y2 = conv_branch(1, 5, w5_ref)
        y3 = conv_branch(2, 7, w7_ref)
        x4 = slab[_PAD:_PAD + TILE_H, :, 3 * C:4 * C].reshape(TILE_H * W, C)

        # fused concat + conv5(1x1) + bias + ReLU epilogue: one deep (4C) dot,
        # the (N,H,W,4C) concat tensor never round-trips through HBM.
        cat = jnp.concatenate([y1.astype(slab.dtype), y2.astype(slab.dtype),
                               y3.astype(slab.dtype), x4], axis=-1)
        out = jnp.dot(cat, wc5_ref[...], preferred_element_type=jnp.float32)
        out = jnp.maximum(out + b5_ref[...], 0.0)
        o_ref[...] = out[None].astype(o_ref.dtype)        # lane-dense 4C store

    return kernel


def pyramid_convs_concat_conv5(yp_nhwc, wk_list, bk_list, w5, b5,
                               out_dtype, tile_h=None):
    """3x3/5x5/7x7 branch convs + x4 pass-through + concat + conv5, one kernel."""
    N, H, W, C4 = yp_nhwc.shape
    C = C4 // 4
    cd = yp_nhwc.dtype
    cd_size = jnp.dtype(cd).itemsize
    assert H >= _PAD, "TODO(synk): H < 3 needs a dedicated tiny-image path"

    weight_bytes = 2 * (9 + 25 + 49 + 16) * C * C * cd_size + 2 * 8 * C * 4
    th = _pick_tile_h(H, W, C, cd_size, weight_bytes, tile_h)
    nb = H // th
    total = N * nb
    nsplit = 2 if (total % 2 == 0 and total >= 2) else 1   # v7x megacore band split
    spc = total // nsplit
    rows = th + 2 * _PAD

    w_fold = [w.reshape(k, k * C, C).astype(cd)
              for w, k in zip(wk_list, (3, 5, 7))]
    bk = jnp.stack([b.reshape(1, C) for b in bk_list]).astype(jnp.float32)

    kernel = _make_pyramid_kernel(H, W, C, th, nb, spc)

    def out_map(s, t):
        flat = s * spc + t
        return (flat // nb, flat % nb, 0)

    # TODO(synk): pipeline_mode=pl.Buffered(1) on the grid-constant weight/bias
    # blocks would halve their VMEM footprint; kept at default buffering for
    # maximum portability across Pallas versions.
    out = pl.pallas_call(
        kernel,
        out_shape=jax.ShapeDtypeStruct((N, H * W, C4), out_dtype),
        grid=(nsplit, spc),
        in_specs=[pl.BlockSpec(memory_space=pl.ANY),              # stem out, HBM
                  pl.BlockSpec((3, 3 * C, C), lambda s, t: (0, 0, 0)),
                  pl.BlockSpec((5, 5 * C, C), lambda s, t: (0, 0, 0)),
                  pl.BlockSpec((7, 7 * C, C), lambda s, t: (0, 0, 0)),
                  pl.BlockSpec((3, 1, C), lambda s, t: (0, 0, 0)),
                  pl.BlockSpec((C4, C4), lambda s, t: (0, 0)),
                  pl.BlockSpec((1, C4), lambda s, t: (0, 0))],
        out_specs=pl.BlockSpec((1, th * W, C4), out_map),
        scratch_shapes=[pltpu.VMEM((2 * rows, W, C4), cd),
                        pltpu.SemaphoreType.DMA((3, 2))],
        compiler_params=pltpu.CompilerParams(
            dimension_semantics=("parallel", "arbitrary"),
            vmem_limit_bytes=_VMEM_LIMIT),
    )(yp_nhwc, w_fold[0], w_fold[1], w_fold[2], bk,
      w5.astype(cd), b5.reshape(1, C4).astype(jnp.float32))
    return out.reshape(N, H, W, C4)


# ---------------------------------------------------------------------------
# SizePyramid forward (NL='relu', no batchnorm — the module defaults)
# ---------------------------------------------------------------------------
def size_pyramid_forward(x_nchw, params, tile_m=None, tile_h=None,
                         compute_dtype=jnp.float32):
    """compute_dtype=jnp.bfloat16 halves HBM/DMA traffic and hits the full-rate
    bf16 MXU path on v6e/v7x; accumulation and bias/ReLU epilogues stay f32."""
    # TODO(synk): NL='prelu'/'swish' and use_bn=True variants of conv_act are
    # not implemented (module defaults are relu / no BN).
    x = jnp.transpose(x_nchw, (0, 2, 3, 1))              # NCHW -> NHWC

    # kernel 1: all four branch 1x1 convs share one read of x and one matmul
    w_all = jnp.concatenate([params['b1_pw_w'], params['b2_pw_w'],
                             params['b3_pw_w'], params['b4_pw_w']], axis=1)
    b_all = jnp.concatenate([params['b1_pw_b'], params['b2_pw_b'],
                             params['b3_pw_b'], params['b4_pw_b']])
    yp = fused_pointwise_stem(x, w_all, b_all, compute_dtype, tile_m=tile_m)

    # kernel 2: 3x3 + 5x5 + 7x7 convs + concat + conv5(1x1) + ReLU, fused
    out = pyramid_convs_concat_conv5(
        yp,
        [params['b1_k_w'], params['b2_k_w'], params['b3_k_w']],
        [params['b1_k_b'], params['b2_k_b'], params['b3_k_b']],
        params['c5_w'], params['c5_b'],
        out_dtype=x_nchw.dtype, tile_h=tile_h)
    return jnp.transpose(out, (0, 3, 1, 2))              # NHWC -> NCHW


# ---------------------------------------------------------------------------
# Deterministic parameter init (shapes from the module __init__)
# ---------------------------------------------------------------------------
def init_params(key, in_c, out_c):
    ks = iter(jax.random.split(key, 24))

    def w_init(shape, fan_in):
        return jax.random.normal(next(ks), shape, jnp.float32) * (0.5 / jnp.sqrt(fan_in))

    def b_init(shape):
        return jax.random.normal(next(ks), shape, jnp.float32) * 0.05

    p = {}
    for name, K in (('b1', 3), ('b2', 5), ('b3', 7)):
        p[f'{name}_pw_w'] = w_init((in_c, out_c), in_c)
        p[f'{name}_pw_b'] = b_init((out_c,))
        p[f'{name}_k_w'] = w_init((K, K, out_c, out_c), K * K * out_c)
        p[f'{name}_k_b'] = b_init((out_c,))
    p['b4_pw_w'] = w_init((in_c, out_c), in_c)
    p['b4_pw_b'] = b_init((out_c,))
    p['c5_w'] = w_init((4 * out_c, 4 * out_c), 4 * out_c)
    p['c5_b'] = b_init((4 * out_c,))
    return p


# ---------------------------------------------------------------------------
# Pure-JAX reference (lax.conv) for correctness check
# ---------------------------------------------------------------------------
def _ref_conv_relu(x, w_hwio, b, K):
    pad = (K - 1) // 2
    y = jax.lax.conv_general_dilated(
        x, w_hwio, window_strides=(1, 1), padding=((pad, pad), (pad, pad)),
        dimension_numbers=('NHWC', 'HWIO', 'NHWC'))
    return jax.nn.relu(y + b)


def size_pyramid_ref(x_nchw, p):
    x = jnp.transpose(x_nchw, (0, 2, 3, 1))

    def pw(x_, w, b):
        return _ref_conv_relu(x_, w.reshape(1, 1, *w.shape), b, 1)

    x1 = _ref_conv_relu(pw(x, p['b1_pw_w'], p['b1_pw_b']), p['b1_k_w'], p['b1_k_b'], 3)
    x2 = _ref_conv_relu(pw(x, p['b2_pw_w'], p['b2_pw_b']), p['b2_k_w'], p['b2_k_b'], 5)
    x3 = _ref_conv_relu(pw(x, p['b3_pw_w'], p['b3_pw_b']), p['b3_k_w'], p['b3_k_b'], 7)
    x4 = pw(x, p['b4_pw_w'], p['b4_pw_b'])
    out = jnp.concatenate([x1, x2, x3, x4], axis=-1)
    out = pw(out, p['c5_w'], p['c5_b'])
    return jnp.transpose(out, (0, 3, 1, 2))


if __name__ == "__main__":
    key = jax.random.PRNGKey(0)
    k_x, k_p = jax.random.split(key)

    N, IN_C, OUT_C, H, W = 2, 4, 8, 16, 16
    x = jax.random.normal(k_x, (N, IN_C, H, W), jnp.float32)   # NCHW like PyTorch
    params = init_params(k_p, IN_C, OUT_C)

    ref = jax.block_until_ready(size_pyramid_ref(x, params))

    # 1) heuristic tiles: nb=1 band per image -> both edge halos clamped+masked
    out = jax.block_until_ready(size_pyramid_forward(x, params))
    assert out.shape == (N, 4 * OUT_C, H, W), out.shape
    assert jnp.allclose(out, ref, rtol=1e-4, atol=1e-4), \
        float(jnp.max(jnp.abs(out - ref)))

    # 2) small explicit tiles: exercises multi-band double-buffered halo DMA,
    #    interior-band prefetch and the multi-step pointwise grid.
    out_small = jax.block_until_ready(
        size_pyramid_forward(x, params, tile_m=128, tile_h=4))
    assert jnp.allclose(out_small, ref, rtol=1e-4, atol=1e-4), \
        float(jnp.max(jnp.abs(out_small - ref)))

    # 3) bf16 compute path (halved HBM traffic, full-rate MXU on v6e/v7x)
    out_bf16 = jax.block_until_ready(
        size_pyramid_forward(x, params, compute_dtype=jnp.bfloat16))
    assert out_bf16.dtype == jnp.float32
    assert jnp.allclose(out_bf16, ref, rtol=1e-1, atol=1e-1), \
        float(jnp.max(jnp.abs(out_bf16 - ref)))

    print("KERNEL_OK")
</pallas_src>

<mosaic_0001>
module attributes {stable_mosaic.version = 11 : i64} {
  func.func @_stem_kernel(%arg0: i32, %arg1: memref<512x4xf32, #tpu.memory_space<vmem>>, %arg2: memref<4x32xf32, #tpu.memory_space<vmem>>, %arg3: memref<1x32xf32, #tpu.memory_space<vmem>>, %arg4: memref<512x32xf32, #tpu.memory_space<vmem>>) attributes {dimension_semantics = [#tpu.dimension_semantics<parallel>], iteration_bounds = array<i64: 1>, scalar_prefetch = 0 : i64, scratch_operands = 0 : i64, tpu.core_type = #tpu.core_type<tc>, window_params = [{transform_indices = @transform_0, window_bounds = array<i64: 512, 4>}, {pipeline_mode = #tpu.pipeline_mode<synchronous>, transform_indices = @transform_1, window_bounds = array<i64: 4, 32>}, {pipeline_mode = #tpu.pipeline_mode<synchronous>, transform_indices = @transform_2, window_bounds = array<i64: 1, 32>}, {transform_indices = @transform_3, window_bounds = array<i64: 512, 32>}]} {
    %c0 = arith.constant 0 : index
    %c0_0 = arith.constant 0 : index
    %0 = vector.load %arg1[%c0, %c0_0] : memref<512x4xf32, #tpu.memory_space<vmem>>, vector<512x4xf32>
    %c0_1 = arith.constant 0 : index
    %c0_2 = arith.constant 0 : index
    %1 = vector.load %arg2[%c0_1, %c0_2] : memref<4x32xf32, #tpu.memory_space<vmem>>, vector<4x32xf32>
    %cst = arith.constant dense<0.000000e+00> : vector<512x32xf32>
    %2 = tpu.matmul %0, %1, %cst {dimension_numbers = #tpu.dot_dimension_numbers<[1], [0], [0], [1], [0, 0, 1, 1], [], []>} : vector<512x4xf32>, vector<4x32xf32>, vector<512x32xf32> -> vector<512x32xf32>
    %c0_3 = arith.constant 0 : index
    %c0_4 = arith.constant 0 : index
    %3 = vector.load %arg3[%c0_3, %c0_4] : memref<1x32xf32, #tpu.memory_space<vmem>>, vector<1x32xf32>
    %4 = vector.broadcast %3 : vector<1x32xf32> to vector<512x32xf32>
    %5 = arith.addf %2, %4 : vector<512x32xf32>
    %cst_5 = arith.constant 0.000000e+00 : f32
    %6 = vector.broadcast %cst_5 : f32 to vector<512x32xf32>
    %7 = arith.maximumf %5, %6 : vector<512x32xf32>
    %c0_6 = arith.constant 0 : index
    %c0_7 = arith.constant 0 : index
    %8 = vector.load %arg4[%c0_6, %c0_7] : memref<512x32xf32, #tpu.memory_space<vmem>>, vector<512x32xf32>
    tpu.vector_store %arg4[%c0_6, %c0_7], %7 {strides = array<i32>} : memref<512x32xf32, #tpu.memory_space<vmem>>, vector<512x32xf32>,
    return
  }
  func.func @transform_0(%arg0: i32) -> (i32, i32) {
    %c0_i32 = arith.constant 0 : i32
    %c0_i32_0 = arith.constant 0 : i32
    return %arg0, %c0_i32 : i32, i32
  }
  func.func @transform_1(%arg0: i32) -> (i32, i32) {
    %c0_i32 = arith.constant 0 : i32
    %c0_i32_0 = arith.constant 0 : i32
    %c0_i32_1 = arith.constant 0 : i32
    return %c0_i32, %c0_i32_0 : i32, i32
  }
  func.func @transform_2(%arg0: i32) -> (i32, i32) {
    %c0_i32 = arith.constant 0 : i32
    %c0_i32_0 = arith.constant 0 : i32
    %c0_i32_1 = arith.constant 0 : i32
    return %c0_i32, %c0_i32_0 : i32, i32
  }
  func.func @transform_3(%arg0: i32) -> (i32, i32) {
    %c0_i32 = arith.constant 0 : i32
    %c0_i32_0 = arith.constant 0 : i32
    return %arg0, %c0_i32 : i32, i32
  }
}

</mosaic_0001>

<llo_original>
// kernel: tpu_custom_call.1
$region0: #{tpu_custom_call.1}
  #allocation0 [shape = 'u32[]', space=smem, size = 0x4, offset = 0x4, fixed_abs, tag = 'smem constant byte address 0x4 - core index']
  #allocation1 [shape = 'u32[144,128]{1,0:T(1,128)}', space=vmem, size = 0x12000, scoped, tag = 'internal scratch']
  %s0 = inlined_call_operand.vmem [shape: f32[512,4], index: 0, kind: input, shape index: {}]
  %s1 = inlined_call_operand.vmem [shape: f32[4,32], index: 1, kind: input, shape index: {}]
  %s2 = inlined_call_operand.vmem [shape: f32[1,32], index: 2, kind: input, shape index: {}]
  %s3 = inlined_call_operand.vmem [shape: f32[512,32], index: 3, kind: output, shape index: {}]
  %s4 = sld [smem:[#allocation0]]
  $region22: #{tpu_custom_call.1} parent=0
    _
  %s6 = ssub.s32 1, %s4
  %s7 = scalar_select 0, %s6, %s4
  // Predicated region
  $region2: #{tpu_custom_call.1} parent=0 // pred_check
    _
  $region3: #{tpu_custom_call.1} parent=0 // pred_check_branch
    %9 = sbr.rel (0) target = $region5
  $region4: #{tpu_custom_call.1} parent=0 // pred_region
    _
  $region5: #{tpu_custom_call.1} parent=0 // pred_fallthru
    _
  // Predicated region
  $region6: #{tpu_custom_call.1} parent=0 // pred_check
    _
  $region7: #{tpu_custom_call.1} parent=0 // pred_check_branch
    %11 = sbr.rel (0) target = $region9
  $region8: #{tpu_custom_call.1} parent=0 // pred_region
    _
  $region9: #{tpu_custom_call.1} parent=0 // pred_fallthru
    _
  // Predicated region
  $region10: #{tpu_custom_call.1} parent=0 // pred_check
    _
  $region11: #{tpu_custom_call.1} parent=0 // pred_check_branch
    %13 = sbr.rel (0) target = $region13
  $region12: #{tpu_custom_call.1} parent=0 // pred_region
    _
  $region13: #{tpu_custom_call.1} parent=0 // pred_fallthru
    _
  %v14 = vld [vmem:[%s0] sm:$0xff]
  %v15 = vld [vmem:[%s0 + $0x8] sm:$0xff]
  %v16 = vld [vmem:[%s0 + $0x10] sm:$0xff]
  %v17 = vld [vmem:[%s0 + $0x18] sm:$0xff]
  %v18 = vld [vmem:[%s0 + $0x20] sm:$0xff]
  %v19 = vld [vmem:[%s0 + $0x28] sm:$0xff]
  %v20 = vld [vmem:[%s0 + $0x30] sm:$0xff]
  %v21 = vld [vmem:[%s0 + $0x38] sm:$0xff]
  %v22 = vld [vmem:[%s0 + $0x40] sm:$0xff]
  %v23 = vld [vmem:[%s0 + $0x48] sm:$0xff]
  %v24 = vld [vmem:[%s0 + $0x50] sm:$0xff]
  %v25 = vld [vmem:[%s0 + $0x58] sm:$0xff]
  %v26 = vld [vmem:[%s0 + $0x60] sm:$0xff]
  %v27 = vld [vmem:[%s0 + $0x68] sm:$0xff]
  %v28 = vld [vmem:[%s0 + $0x70] sm:$0xff]
  %v29 = vld [vmem:[%s0 + $0x78] sm:$0xff]
  %v30 = vld [vmem:[%s0 + $0x80] sm:$0xff]
  %v31 = vld [vmem:[%s0 + $0x88] sm:$0xff]
  %v32 = vld [vmem:[%s0 + $0x90] sm:$0xff]
  %v33 = vld [vmem:[%s0 + $0x98] sm:$0xff]
  %v34 = vld [vmem:[%s0 + $0xa0] sm:$0xff]
  %v35 = vld [vmem:[%s0 + $0xa8] sm:$0xff]
  %v36 = vld [vmem:[%s0 + $0xb0] sm:$0xff]
  %v37 = vld [vmem:[%s0 + $0xb8] sm:$0xff]
  %v38 = vld [vmem:[%s0 + $0xc0] sm:$0xff]
  %v39 = vld [vmem:[%s0 + $0xc8] sm:$0xff]
  %v40 = vld [vmem:[%s0 + $0xd0] sm:$0xff]
  %v41 = vld [vmem:[%s0 + $0xd8] sm:$0xff]
  %v42 = vld [vmem:[%s0 + $0xe0] sm:$0xff]
  %v43 = vld [vmem:[%s0 + $0xe8] sm:$0xff]
  %v44 = vld [vmem:[%s0 + $0xf0] sm:$0xff]
  %v45 = vld [vmem:[%s0 + $0xf8] sm:$0xff]
  %v46 = vld [vmem:[%s0 + $0x100] sm:$0xff]
  %v47 = vld [vmem:[%s0 + $0x108] sm:$0xff]
  %v48 = vld [vmem:[%s0 + $0x110] sm:$0xff]
  %v49 = vld [vmem:[%s0 + $0x118] sm:$0xff]
  %v50 = vld [vmem:[%s0 + $0x120] sm:$0xff]
  %v51 = vld [vmem:[%s0 + $0x128] sm:$0xff]
  %v52 = vld [vmem:[%s0 + $0x130] sm:$0xff]
  %v53 = vld [vmem:[%s0 + $0x138] sm:$0xff]
  %v54 = vld [vmem:[%s0 + $0x140] sm:$0xff]
  %v55 = vld [vmem:[%s0 + $0x148] sm:$0xff]
  %v56 = vld [vmem:[%s0 + $0x150] sm:$0xff]
  %v57 = vld [vmem:[%s0 + $0x158] sm:$0xff]
  %v58 = vld [vmem:[%s0 + $0x160] sm:$0xff]
  %v59 = vld [vmem:[%s0 + $0x168] sm:$0xff]
  %v60 = vld [vmem:[%s0 + $0x170] sm:$0xff]
  %v61 = vld [vmem:[%s0 + $0x178] sm:$0xff]
  %v62 = vld [vmem:[%s0 + $0x180] sm:$0xff]
  %v63 = vld [vmem:[%s0 + $0x188] sm:$0xff]
  %v64 = vld [vmem:[%s0 + $0x190] sm:$0xff]
  %v65 = vld [vmem:[%s0 + $0x198] sm:$0xff]
  %v66 = vld [vmem:[%s0 + $0x1a0] sm:$0xff]
  %v67 = vld [vmem:[%s0 + $0x1a8] sm:$0xff]
  %v68 = vld [vmem:[%s0 + $0x1b0] sm:$0xff]
  %v69 = vld [vmem:[%s0 + $0x1b8] sm:$0xff]
  %v70 = vld [vmem:[%s0 + $0x1c0] sm:$0xff]
  %v71 = vld [vmem:[%s0 + $0x1c8] sm:$0xff]
  %v72 = vld [vmem:[%s0 + $0x1d0] sm:$0xff]
  %v73 = vld [vmem:[%s0 + $0x1d8] sm:$0xff]
  %v74 = vld [vmem:[%s0 + $0x1e0] sm:$0xff]
  %v75 = vld [vmem:[%s0 + $0x1e8] sm:$0xff]
  %v76 = vld [vmem:[%s0 + $0x1f0] sm:$0xff]
  %v77 = vld [vmem:[%s0 + $0x1f8] sm:$0xff]
  %v78 = vld [vmem:[%s1] sm:$0xf]
  %v79 = vld [vmem:[%s2] sm:$0x1]
  %v81 = vlaneseq
  %v82 = vshrl.u32 %v81, 7
  %v83 = vsub.s32 0, %v82
  %v84 = vrot.slane %v79, %v83
  %vm86 = vcmask 31744
  %v88 = vsel %vm86, %v14, 0
  %v91 = vsel %vm86, %v15, 0
  %v94 = vsel %vm86, %v16, 0
  %v97 = vsel %vm86, %v17, 0
  %v100 = vsel %vm86, %v18, 0
  %v103 = vsel %vm86, %v19, 0
  %v106 = vsel %vm86, %v20, 0
  %v109 = vsel %vm86, %v21, 0
  %v112 = vsel %vm86, %v22, 0
  %v115 = vsel %vm86, %v23, 0
  %v118 = vsel %vm86, %v24, 0
  %v121 = vsel %vm86, %v25, 0
  %v124 = vsel %vm86, %v26, 0
  %v127 = vsel %vm86, %v27, 0
  %v130 = vsel %vm86, %v28, 0
  %v133 = vsel %vm86, %v29, 0
  %v136 = vsel %vm86, %v30, 0
  %v139 = vsel %vm86, %v31, 0
  %v142 = vsel %vm86, %v32, 0
  %v145 = vsel %vm86, %v33, 0
  %v148 = vsel %vm86, %v34, 0
  %v151 = vsel %vm86, %v35, 0
  %v154 = vsel %vm86, %v36, 0
  %v157 = vsel %vm86, %v37, 0
  %v160 = vsel %vm86, %v38, 0
  %v163 = vsel %vm86, %v39, 0
  %v166 = vsel %vm86, %v40, 0
  %v169 = vsel %vm86, %v41, 0
  %v172 = vsel %vm86, %v42, 0
  %v175 = vsel %vm86, %v43, 0
  %v178 = vsel %vm86, %v44, 0
  %v181 = vsel %vm86, %v45, 0
  %v184 = vsel %vm86, %v46, 0
  %v187 = vsel %vm86, %v47, 0
  %v190 = vsel %vm86, %v48, 0
  %v193 = vsel %vm86, %v49, 0
  %v196 = vsel %vm86, %v50, 0
  %v199 = vsel %vm86, %v51, 0
  %v202 = vsel %vm86, %v52, 0
  %v205 = vsel %vm86, %v53, 0
  %v208 = vsel %vm86, %v54, 0
  %v211 = vsel %vm86, %v55, 0
  %v214 = vsel %vm86, %v56, 0
  %v217 = vsel %vm86, %v57, 0
  %v220 = vsel %vm86, %v58, 0
  %v223 = vsel %vm86, %v59, 0
  %v226 = vsel %vm86, %v60, 0
  %v229 = vsel %vm86, %v61, 0
  %v232 = vsel %vm86, %v62, 0
  %v235 = vsel %vm86, %v63, 0
  %v238 = vsel %vm86, %v64, 0
  %v241 = vsel %vm86, %v65, 0
  %v244 = vsel %vm86, %v66, 0
  %v247 = vsel %vm86, %v67, 0
  %v250 = vsel %vm86, %v68, 0
  %v253 = vsel %vm86, %v69, 0
  %v256 = vsel %vm86, %v70, 0
  %v259 = vsel %vm86, %v71, 0
  %v262 = vsel %vm86, %v72, 0
  %v265 = vsel %vm86, %v73, 0
  %v268 = vsel %vm86, %v74, 0
  %v271 = vsel %vm86, %v75, 0
  %v274 = vsel %vm86, %v76, 0
  %v277 = vsel %vm86, %v77, 0
  %vm279 = vcmask 1043456
  %v281 = vsel %vm279, %v78, 0
  %283 = vmatprep.subr.mxu0 0.0
  %284 = vmatpush1.msra.mxu0 %v281
  %285 = vmatprep.subr.mxu0 0.0
  %286 = vmatpush1.msra.mxu0 0.0
  %287 = vmatprep.subr.mxu0 0.0
  %288 = vmatpush1.msra.mxu0 0.0
  %289 = vmatprep.subr.mxu0 0.0
  %290 = vmatpush1.msra.mxu0 0.0
  %291 = vmatprep.subr.mxu0 0.0
  %292 = vmatpush1.msra.mxu0 0.0
  %293 = vmatprep.subr.mxu0 0.0
  %294 = vmatpush1.msra.mxu0 0.0
  %295 = vmatprep.subr.mxu0 0.0
  %296 = vmatpush1.msra.mxu0 0.0
  %297 = vmatprep.subr.mxu0 0.0
  %298 = vmatpush1.msra.mxu0 0.0
  %299 = vmatprep.subr.mxu0 0.0
  %300 = vmatpush1.msra.mxu0 0.0
  %301 = vmatprep.subr.mxu0 0.0
  %302 = vmatpush1.msra.mxu0 0.0
  %303 = vmatprep.subr.mxu0 0.0
  %304 = vmatpush1.msra.mxu0 0.0
  %305 = vmatprep.subr.mxu0 0.0
  %306 = vmatpush1.msra.mxu0 0.0
  %307 = vmatprep.subr.mxu0 0.0
  %308 = vmatpush1.msra.mxu0 0.0
  %309 = vmatprep.subr.mxu0 0.0
  %310 = vmatpush1.msra.mxu0 0.0
  %311 = vmatprep.subr.mxu0 0.0
  %312 = vmatpush1.msra.mxu0 0.0
  %313 = vmatprep.subr.mxu0 0.0
  %314 = vmatpush1.msra.mxu0 0.0
  %315 = vmatprep.subr.mxu0 0.0
  %316 = vmatpush1.msra.mxu0 0.0
  %317 = vmatprep.subr.mxu0 0.0
  %318 = vmatpush1.msra.mxu0 0.0
  %319 = vmatprep.subr.mxu0 0.0
  %320 = vmatpush1.msra.mxu0 0.0
  %321 = vmatprep.subr.mxu0 0.0
  %322 = vmatpush1.msra.mxu0 0.0
  %323 = vmatprep.subr.mxu0 0.0
  %324 = vmatpush1.msra.mxu0 0.0
  %325 = vmatprep.subr.mxu0 0.0
  %326 = vmatpush1.msra.mxu0 0.0
  %327 = vmatprep.subr.mxu0 0.0
  %328 = vmatpush1.msra.mxu0 0.0
  %329 = vmatprep.subr.mxu0 0.0
  %330 = vmatpush1.msra.mxu0 0.0
  %331 = vmatprep.subr.mxu0 0.0
  %332 = vmatpush1.msra.mxu0 0.0
  %333 = vmatprep.subr.mxu0 0.0
  %334 = vmatpush1.msra.mxu0 0.0
  %335 = vmatprep.subr.mxu0 0.0
  %336 = vmatpush1.msra.mxu0 0.0
  %337 = vmatprep.subr.mxu0 0.0
  %338 = vmatpush1.msra.mxu0 0.0
  %339 = vmatprep.subr.mxu0 0.0
  %340 = vmatpush1.msra.mxu0 0.0
  %341 = vmatprep.subr.mxu0 0.0
  %342 = vmatpush1.msra.mxu0 0.0
  %343 = vmatprep.subr.mxu0 0.0
  %344 = vmatpush1.msra.mxu0 0.0
  %345 = vmatprep.subr.mxu0 0.0
  %346 = vmatpush1.msra.mxu0 0.0
  %347 = vmatprep.mubr.f32.mxu0 0.0
  %348 = vmatmul.mubr.f32.gmra.mrb[0].mxu0 %v88
  %v349 = vpop.f32.mrb[0].mxu0
  %v350 = vadd.f32 %v84, %v349
  %v351 = vpop.f32.mrb[0].mxu0
  %352 = vmatprep.mubr.f32.mxu0 0.0
  %353 = vmatmul.mubr.f32.gmra.mrb[0].mxu0 %v91
  %v354 = vpop.f32.mrb[0].mxu0
  %v355 = vadd.f32 %v84, %v354
  %v356 = vpop.f32.mrb[0].mxu0
  %357 = vmatprep.mubr.f32.mxu0 0.0
  %358 = vmatmul.mubr.f32.gmra.mrb[0].mxu0 %v94
  %v359 = vpop.f32.mrb[0].mxu0
  %v360 = vadd.f32 %v84, %v359
  %v361 = vpop.f32.mrb[0].mxu0
  %362 = vmatprep.mubr.f32.mxu0 0.0
  %363 = vmatmul.mubr.f32.gmra.mrb[0].mxu0 %v97
  %v364 = vpop.f32.mrb[0].mxu0
  %v365 = vadd.f32 %v84, %v364
  %v366 = vpop.f32.mrb[0].mxu0
  %367 = vmatprep.mubr.f32.mxu0 0.0
  %368 = vmatmul.mubr.f32.gmra.mrb[0].mxu0 %v100
  %v369 = vpop.f32.mrb[0].mxu0
  %v370 = vadd.f32 %v84, %v369
  %v371 = vpop.f32.mrb[0].mxu0
  %372 = vmatprep.mubr.f32.mxu0 0.0
  %373 = vmatmul.mubr.f32.gmra.mrb[0].mxu0 %v103
  %v374 = vpop.f32.mrb[0].mxu0
  %v375 = vadd.f32 %v84, %v374
  %v376 = vpop.f32.mrb[0].mxu0
  %377 = vmatprep.mubr.f32.mxu0 0.0
  %378 = vmatmul.mubr.f32.gmra.mrb[0].mxu0 %v106
  %v379 = vpop.f32.mrb[0].mxu0
  %v380 = vadd.f32 %v84, %v379
  %v381 = vpop.f32.mrb[0].mxu0
  %382 = vmatprep.mubr.f32.mxu0 0.0
  %383 = vmatmul.mubr.f32.gmra.mrb[0].mxu0 %v109
  %v384 = vpop.f32.mrb[0].mxu0
  %v385 = vadd.f32 %v84, %v384
  %v386 = vpop.f32.mrb[0].mxu0
  %387 = vmatprep.mubr.f32.mxu0 0.0
  %388 = vmatmul.mubr.f32.gmra.mrb[0].mxu0 %v112
  %v389 = vpop.f32.mrb[0].mxu0
  %v390 = vadd.f32 %v84, %v389
  %v391 = vpop.f32.mrb[0].mxu0
  %392 = vmatprep.mubr.f32.mxu0 0.0
  %393 = vmatmul.mubr.f32.gmra.mrb[0].mxu0 %v115
  %v394 = vpop.f32.mrb[0].mxu0
  %v395 = vadd.f32 %v84, %v394
  %v396 = vpop.f32.mrb[0].mxu0
  %397 = vmatprep.mubr.f32.mxu0 0.0
  %398 = vmatmul.mubr.f32.gmra.mrb[0].mxu0 %v118
  %v399 = vpop.f32.mrb[0].mxu0
  %v400 = vadd.f32 %v84, %v399
  %v401 = vpop.f32.mrb[0].mxu0
  %402 = vmatprep.mubr.f32.mxu0 0.0
  %403 = vmatmul.mubr.f32.gmra.mrb[0].mxu0 %v121
  %v404 = vpop.f32.mrb[0].mxu0
  %v405 = vadd.f32 %v84, %v404
  %v406 = vpop.f32.mrb[0].mxu0
  %407 = vmatprep.mubr.f32.mxu0 0.0
  %408 = vmatmul.mubr.f32.gmra.mrb[0].mxu0 %v124
  %v409 = vpop.f32.mrb[0].mxu0
  %v410 = vadd.f32 %v84, %v409
  %v411 = vpop.f32.mrb[0].mxu0
  %412 = vmatprep.mubr.f32.mxu0 0.0
  %413 = vmatmul.mubr.f32.gmra.mrb[0].mxu0 %v127
  %v414 = vpop.f32.mrb[0].mxu0
  %v415 = vadd.f32 %v84, %v414
  %v416 = vpop.f32.mrb[0].mxu0
  %417 = vmatprep.mubr.f32.mxu0 0.0
  %418 = vmatmul.mubr.f32.gmra.mrb[0].mxu0 %v130
  %v419 = vpop.f32.mrb[0].mxu0
  %v420 = vadd.f32 %v84, %v419
  %v421 = vpop.f32.mrb[0].mxu0
  %422 = vmatprep.mubr.f32.mxu0 0.0
  %423 = vmatmul.mubr.f32.gmra.mrb[0].mxu0 %v133
  %v424 = vpop.f32.mrb[0].mxu0
  %v425 = vadd.f32 %v84, %v424
  %v426 = vpop.f32.mrb[0].mxu0
  %427 = vmatprep.mubr.f32.mxu0 0.0
  %428 = vmatmul.mubr.f32.gmra.mrb[0].mxu0 %v136
  %v429 = vpop.f32.mrb[0].mxu0
  %v430 = vadd.f32 %v84, %v429
  %v431 = vpop.f32.mrb[0].mxu0
  %432 = vmatprep.mubr.f32.mxu0 0.0
  %433 = vmatmul.mubr.f32.gmra.mrb[0].mxu0 %v139
  %v434 = vpop.f32.mrb[0].mxu0
  %v435 = vadd.f32 %v84, %v434
  %v436 = vpop.f32.mrb[0].mxu0
  %437 = vmatprep.mubr.f32.mxu0 0.0
  %438 = vmatmul.mubr.f32.gmra.mrb[0].mxu0 %v142
  %v439 = vpop.f32.mrb[0].mxu0
  %v440 = vadd.f32 %v84, %v439
  %v441 = vpop.f32.mrb[0].mxu0
  %442 = vmatprep.mubr.f32.mxu0 0.0
  %443 = vmatmul.mubr.f32.gmra.mrb[0].mxu0 %v145
  %v444 = vpop.f32.mrb[0].mxu0
  %v445 = vadd.f32 %v84, %v444
  %v446 = vpop.f32.mrb[0].mxu0
  %447 = vmatprep.mubr.f32.mxu0 0.0
  %448 = vmatmul.mubr.f32.gmra.mrb[0].mxu0 %v148
  %v449 = vpop.f32.mrb[0].mxu0
  %v450 = vadd.f32 %v84, %v449
  %v451 = vpop.f32.mrb[0].mxu0
  %452 = vmatprep.mubr.f32.mxu0 0.0
  %453 = vmatmul.mubr.f32.gmra.mrb[0].mxu0 %v151
  %v454 = vpop.f32.mrb[0].mxu0
  %v455 = vadd.f32 %v84, %v454
  %v456 = vpop.f32.mrb[0].mxu0
  %457 = vmatprep.mubr.f32.mxu0 0.0
  %458 = vmatmul.mubr.f32.gmra.mrb[0].mxu0 %v154
  %v459 = vpop.f32.mrb[0].mxu0
  %v460 = vadd.f32 %v84, %v459
  %v461 = vpop.f32.mrb[0].mxu0
  %462 = vmatprep.mubr.f32.mxu0 0.0
  %463 = vmatmul.mubr.f32.gmra.mrb[0].mxu0 %v157
  %v464 = vpop.f32.mrb[0].mxu0
  %v465 = vadd.f32 %v84, %v464
  %v466 = vpop.f32.mrb[0].mxu0
  %467 = vmatprep.mubr.f32.mxu0 0.0
  %468 = vmatmul.mubr.f32.gmra.mrb[0].mxu0 %v160
  %v469 = vpop.f32.mrb[0].mxu0
  %v470 = vadd.f32 %v84, %v469
  %v471 = vpop.f32.mrb[0].mxu0
  %472 = vmatprep.mubr.f32.mxu0 0.0
  %473 = vmatmul.mubr.f32.gmra.mrb[0].mxu0 %v163
  %v474 = vpop.f32.mrb[0].mxu0
  %v475 = vadd.f32 %v84, %v474
  %v476 = vpop.f32.mrb[0].mxu0
  %477 = vmatprep.mubr.f32.mxu0 0.0
  %478 = vmatmul.mubr.f32.gmra.mrb[0].mxu0 %v166
  %v479 = vpop.f32.mrb[0].mxu0
  %v480 = vadd.f32 %v84, %v479
  %v481 = vpop.f32.mrb[0].mxu0
  %482 = vmatprep.mubr.f32.mxu0 0.0
  %483 = vmatmul.mubr.f32.gmra.mrb[0].mxu0 %v169
  %v484 = vpop.f32.mrb[0].mxu0
  %v485 = vadd.f32 %v84, %v484
  %v486 = vpop.f32.mrb[0].mxu0
  %487 = vmatprep.mubr.f32.mxu0 0.0
  %488 = vmatmul.mubr.f32.gmra.mrb[0].mxu0 %v172
  %v489 = vpop.f32.mrb[0].mxu0
  %v490 = vadd.f32 %v84, %v489
  %v491 = vpop.f32.mrb[0].mxu0
  %492 = vmatprep.mubr.f32.mxu0 0.0
  %493 = vmatmul.mubr.f32.gmra.mrb[0].mxu0 %v175
  %v494 = vpop.f32.mrb[0].mxu0
  %v495 = vadd.f32 %v84, %v494
  %v496 = vpop.f32.mrb[0].mxu0
  %497 = vmatprep.mubr.f32.mxu0 0.0
  %498 = vmatmul.mubr.f32.gmra.mrb[0].mxu0 %v178
  %v499 = vpop.f32.mrb[0].mxu0
  %v500 = vadd.f32 %v84, %v499
  %v501 = vpop.f32.mrb[0].mxu0
  %502 = vmatprep.mubr.f32.mxu0 0.0
  %503 = vmatmul.mubr.f32.gmra.mrb[0].mxu0 %v181
  %v504 = vpop.f32.mrb[0].mxu0
  %v505 = vadd.f32 %v84, %v504
  %v506 = vpop.f32.mrb[0].mxu0
  %507 = vmatprep.mubr.f32.mxu0 0.0
  %508 = vmatmul.mubr.f32.gmra.mrb[0].mxu0 %v184
  %v509 = vpop.f32.mrb[0].mxu0
  %v510 = vadd.f32 %v84, %v509
  %v511 = vpop.f32.mrb[0].mxu0
  %512 = vmatprep.mubr.f32.mxu0 0.0
  %513 = vmatmul.mubr.f32.gmra.mrb[0].mxu0 %v187
  %v514 = vpop.f32.mrb[0].mxu0
  %v515 = vadd.f32 %v84, %v514
  %v516 = vpop.f32.mrb[0].mxu0
  %517 = vmatprep.mubr.f32.mxu0 0.0
  %518 = vmatmul.mubr.f32.gmra.mrb[0].mxu0 %v190
  %v519 = vpop.f32.mrb[0].mxu0
  %v520 = vadd.f32 %v84, %v519
  %v521 = vpop.f32.mrb[0].mxu0
  %522 = vmatprep.mubr.f32.mxu0 0.0
  %523 = vmatmul.mubr.f32.gmra.mrb[0].mxu0 %v193
  %v524 = vpop.f32.mrb[0].mxu0
  %v525 = vadd.f32 %v84, %v524
  %v526 = vpop.f32.mrb[0].mxu0
  %527 = vmatprep.mubr.f32.mxu0 0.0
  %528 = vmatmul.mubr.f32.gmra.mrb[0].mxu0 %v196
  %v529 = vpop.f32.mrb[0].mxu0
  %v530 = vadd.f32 %v84, %v529
  %v531 = vpop.f32.mrb[0].mxu0
  %532 = vmatprep.mubr.f32.mxu0 0.0
  %533 = vmatmul.mubr.f32.gmra.mrb[0].mxu0 %v199
  %v534 = vpop.f32.mrb[0].mxu0
  %v535 = vadd.f32 %v84, %v534
  %v536 = vpop.f32.mrb[0].mxu0
  %537 = vmatprep.mubr.f32.mxu0 0.0
  %538 = vmatmul.mubr.f32.gmra.mrb[0].mxu0 %v202
  %v539 = vpop.f32.mrb[0].mxu0
  %v540 = vadd.f32 %v84, %v539
  %v541 = vpop.f32.mrb[0].mxu0
  %542 = vmatprep.mubr.f32.mxu0 0.0
  %543 = vmatmul.mubr.f32.gmra.mrb[0].mxu0 %v205
  %v544 = vpop.f32.mrb[0].mxu0
  %v545 = vadd.f32 %v84, %v544
  %v546 = vpop.f32.mrb[0].mxu0
  %547 = vmatprep.mubr.f32.mxu0 0.0
  %548 = vmatmul.mubr.f32.gmra.mrb[0].mxu0 %v208
  %v549 = vpop.f32.mrb[0].mxu0
  %v550 = vadd.f32 %v84, %v549
  %v551 = vpop.f32.mrb[0].mxu0
  %552 = vmatprep.mubr.f32.mxu0 0.0
  %553 = vmatmul.mubr.f32.gmra.mrb[0].mxu0 %v211
  %v554 = vpop.f32.mrb[0].mxu0
  %v555 = vadd.f32 %v84, %v554
  %v556 = vpop.f32.mrb[0].mxu0
  %557 = vmatprep.mubr.f32.mxu0 0.0
  %558 = vmatmul.mubr.f32.gmra.mrb[0].mxu0 %v214
  %v559 = vpop.f32.mrb[0].mxu0
  %v560 = vadd.f32 %v84, %v559
  %v561 = vpop.f32.mrb[0].mxu0
  %562 = vmatprep.mubr.f32.mxu0 0.0
  %563 = vmatmul.mubr.f32.gmra.mrb[0].mxu0 %v217
  %v564 = vpop.f32.mrb[0].mxu0
  %v565 = vadd.f32 %v84, %v564
  %v566 = vpop.f32.mrb[0].mxu0
  %567 = vmatprep.mubr.f32.mxu0 0.0
  %568 = vmatmul.mubr.f32.gmra.mrb[0].mxu0 %v220
  %v569 = vpop.f32.mrb[0].mxu0
  %v570 = vadd.f32 %v84, %v569
  %v571 = vpop.f32.mrb[0].mxu0
  %572 = vmatprep.mubr.f32.mxu0 0.0
  %573 = vmatmul.mubr.f32.gmra.mrb[0].mxu0 %v223
  %v574 = vpop.f32.mrb[0].mxu0
  %v575 = vadd.f32 %v84, %v574
  %v576 = vpop.f32.mrb[0].mxu0
  %577 = vmatprep.mubr.f32.mxu0 0.0
  %578 = vmatmul.mubr.f32.gmra.mrb[0].mxu0 %v226
  %v579 = vpop.f32.mrb[0].mxu0
  %v580 = vadd.f32 %v84, %v579
  %v581 = vpop.f32.mrb[0].mxu0
  %582 = vmatprep.mubr.f32.mxu0 0.0
  %583 = vmatmul.mubr.f32.gmra.mrb[0].mxu0 %v229
  %v584 = vpop.f32.mrb[0].mxu0
  %v585 = vadd.f32 %v84, %v584
  %v586 = vpop.f32.mrb[0].mxu0
  %587 = vmatprep.mubr.f32.mxu0 0.0
  %588 = vmatmul.mubr.f32.gmra.mrb[0].mxu0 %v232
  %v589 = vpop.f32.mrb[0].mxu0
  %v590 = vadd.f32 %v84, %v589
  %v591 = vpop.f32.mrb[0].mxu0
  %592 = vmatprep.mubr.f32.mxu0 0.0
  %593 = vmatmul.mubr.f32.gmra.mrb[0].mxu0 %v235
  %v594 = vpop.f32.mrb[0].mxu0
  %v595 = vadd.f32 %v84, %v594
  %v596 = vpop.f32.mrb[0].mxu0
  %597 = vmatprep.mubr.f32.mxu0 0.0
  %598 = vmatmul.mubr.f32.gmra.mrb[0].mxu0 %v238
  %v599 = vpop.f32.mrb[0].mxu0
  %v600 = vadd.f32 %v84, %v599
  %v601 = vpop.f32.mrb[0].mxu0
  %602 = vmatprep.mubr.f32.mxu0 0.0
  %603 = vmatmul.mubr.f32.gmra.mrb[0].mxu0 %v241
  %v604 = vpop.f32.mrb[0].mxu0
  %v605 = vadd.f32 %v84, %v604
  %v606 = vpop.f32.mrb[0].mxu0
  %607 = vmatprep.mubr.f32.mxu0 0.0
  %608 = vmatmul.mubr.f32.gmra.mrb[0].mxu0 %v244
  %v609 = vpop.f32.mrb[0].mxu0
  %v610 = vadd.f32 %v84, %v609
  %v611 = vpop.f32.mrb[0].mxu0
  %612 = vmatprep.mubr.f32.mxu0 0.0
  %613 = vmatmul.mubr.f32.gmra.mrb[0].mxu0 %v247
  %v614 = vpop.f32.mrb[0].mxu0
  %v615 = vadd.f32 %v84, %v614
  %v616 = vpop.f32.mrb[0].mxu0
  %617 = vmatprep.mubr.f32.mxu0 0.0
  %618 = vmatmul.mubr.f32.gmra.mrb[0].mxu0 %v250
  %v619 = vpop.f32.mrb[0].mxu0
  %v620 = vadd.f32 %v84, %v619
  %v621 = vpop.f32.mrb[0].mxu0
  %622 = vmatprep.mubr.f32.mxu0 0.0
  %623 = vmatmul.mubr.f32.gmra.mrb[0].mxu0 %v253
  %v624 = vpop.f32.mrb[0].mxu0
  %v625 = vadd.f32 %v84, %v624
  %v626 = vpop.f32.mrb[0].mxu0
  %627 = vmatprep.mubr.f32.mxu0 0.0
  %628 = vmatmul.mubr.f32.gmra.mrb[0].mxu0 %v256
  %v629 = vpop.f32.mrb[0].mxu0
  %v630 = vadd.f32 %v84, %v629
  %v631 = vpop.f32.mrb[0].mxu0
  %632 = vmatprep.mubr.f32.mxu0 0.0
  %633 = vmatmul.mubr.f32.gmra.mrb[0].mxu0 %v259
  %v634 = vpop.f32.mrb[0].mxu0
  %v635 = vadd.f32 %v84, %v634
  %v636 = vpop.f32.mrb[0].mxu0
  %637 = vmatprep.mubr.f32.mxu0 0.0
  %638 = vmatmul.mubr.f32.gmra.mrb[0].mxu0 %v262
  %v639 = vpop.f32.mrb[0].mxu0
  %v640 = vadd.f32 %v84, %v639
  %v641 = vpop.f32.mrb[0].mxu0
  %642 = vmatprep.mubr.f32.mxu0 0.0
  %643 = vmatmul.mubr.f32.gmra.mrb[0].mxu0 %v265
  %v644 = vpop.f32.mrb[0].mxu0
  %v645 = vadd.f32 %v84, %v644
  %v646 = vpop.f32.mrb[0].mxu0
  %647 = vmatprep.mubr.f32.mxu0 0.0
  %648 = vmatmul.mubr.f32.gmra.mrb[0].mxu0 %v268
  %v649 = vpop.f32.mrb[0].mxu0
  %v650 = vadd.f32 %v84, %v649
  %v651 = vpop.f32.mrb[0].mxu0
  %652 = vmatprep.mubr.f32.mxu0 0.0
  %653 = vmatmul.mubr.f32.gmra.mrb[0].mxu0 %v271
  %v654 = vpop.f32.mrb[0].mxu0
  %v655 = vadd.f32 %v84, %v654
  %v656 = vpop.f32.mrb[0].mxu0
  %657 = vmatprep.mubr.f32.mxu0 0.0
  %658 = vmatmul.mubr.f32.gmra.mrb[0].mxu0 %v274
  %v659 = vpop.f32.mrb[0].mxu0
  %v660 = vadd.f32 %v84, %v659
  %v661 = vpop.f32.mrb[0].mxu0
  %662 = vmatprep.mubr.f32.mxu0 0.0
  %663 = vmatmul.mubr.f32.gmra.mrb[0].mxu0 %v277
  %v664 = vpop.f32.mrb[0].mxu0
  %v665 = vadd.f32 %v84, %v664
  %v666 = vpop.f32.mrb[0].mxu0
  %667 = vdwg.mxu0
  %v668 = vmax.f32 %v350, 0.0
  %v669 = vmax.f32 %v355, 0.0
  %v670 = vmax.f32 %v360, 0.0
  %v671 = vmax.f32 %v365, 0.0
  %v672 = vmax.f32 %v370, 0.0
  %v673 = vmax.f32 %v375, 0.0
  %v674 = vmax.f32 %v380, 0.0
  %v675 = vmax.f32 %v385, 0.0
  %v676 = vmax.f32 %v390, 0.0
  %v677 = vmax.f32 %v395, 0.0
  %v678 = vmax.f32 %v400, 0.0
  %v679 = vmax.f32 %v405, 0.0
  %v680 = vmax.f32 %v410, 0.0
  %v681 = vmax.f32 %v415, 0.0
  %v682 = vmax.f32 %v420, 0.0
  %v683 = vmax.f32 %v425, 0.0
  %v684 = vmax.f32 %v430, 0.0
  %v685 = vmax.f32 %v435, 0.0
  %v686 = vmax.f32 %v440, 0.0
  %v687 = vmax.f32 %v445, 0.0
  %v688 = vmax.f32 %v450, 0.0
  %v689 = vmax.f32 %v455, 0.0
  %v690 = vmax.f32 %v460, 0.0
  %v691 = vmax.f32 %v465, 0.0
  %v692 = vmax.f32 %v470, 0.0
  %v693 = vmax.f32 %v475, 0.0
  %v694 = vmax.f32 %v480, 0.0
  %v695 = vmax.f32 %v485, 0.0
  %v696 = vmax.f32 %v490, 0.0
  %v697 = vmax.f32 %v495, 0.0
  %v698 = vmax.f32 %v500, 0.0
  %v699 = vmax.f32 %v505, 0.0
  %v700 = vmax.f32 %v510, 0.0
  %v701 = vmax.f32 %v515, 0.0
  %v702 = vmax.f32 %v520, 0.0
  %v703 = vmax.f32 %v525, 0.0
  %v704 = vmax.f32 %v530, 0.0
  %v705 = vmax.f32 %v535, 0.0
  %v706 = vmax.f32 %v540, 0.0
  %v707 = vmax.f32 %v545, 0.0
  %v708 = vmax.f32 %v550, 0.0
  %v709 = vmax.f32 %v555, 0.0
  %v710 = vmax.f32 %v560, 0.0
  %v711 = vmax.f32 %v565, 0.0
  %v712 = vmax.f32 %v570, 0.0
  %v713 = vmax.f32 %v575, 0.0
  %v714 = vmax.f32 %v580, 0.0
  %v715 = vmax.f32 %v585, 0.0
  %v716 = vmax.f32 %v590, 0.0
  %v717 = vmax.f32 %v595, 0.0
  %v718 = vmax.f32 %v600, 0.0
  %v719 = vmax.f32 %v605, 0.0
  %v720 = vmax.f32 %v610, 0.0
  %v721 = vmax.f32 %v615, 0.0
  %v722 = vmax.f32 %v620, 0.0
  %v723 = vmax.f32 %v625, 0.0
  %v724 = vmax.f32 %v630, 0.0
  %v725 = vmax.f32 %v635, 0.0
  %v726 = vmax.f32 %v640, 0.0
  %v727 = vmax.f32 %v645, 0.0
  %v728 = vmax.f32 %v650, 0.0
  %v729 = vmax.f32 %v655, 0.0
  %v730 = vmax.f32 %v660, 0.0
  %v731 = vmax.f32 %v665, 0.0
  %vm732 = vcmask 261120
  %733 = vst.msk [vmem:[%s3] sm:$0xff] %vm732, %v668
  %734 = vst.msk [vmem:[%s3 + $0x8] sm:$0xff] %vm732, %v669
  %735 = vst.msk [vmem:[%s3 + $0x10] sm:$0xff] %vm732, %v670
  %736 = vst.msk [vmem:[%s3 + $0x18] sm:$0xff] %vm732, %v671
  %737 = vst.msk [vmem:[%s3 + $0x20] sm:$0xff] %vm732, %v672
  %738 = vst.msk [vmem:[%s3 + $0x28] sm:$0xff] %vm732, %v673
  %739 = vst.msk [vmem:[%s3 + $0x30] sm:$0xff] %vm732, %v674
  %740 = vst.msk [vmem:[%s3 + $0x38] sm:$0xff] %vm732, %v675
  %741 = vst.msk [vmem:[%s3 + $0x40] sm:$0xff] %vm732, %v676
  %742 = vst.msk [vmem:[%s3 + $0x48] sm:$0xff] %vm732, %v677
  %743 = vst.msk [vmem:[%s3 + $0x50] sm:$0xff] %vm732, %v678
  %744 = vst.msk [vmem:[%s3 + $0x58] sm:$0xff] %vm732, %v679
  %745 = vst.msk [vmem:[%s3 + $0x60] sm:$0xff] %vm732, %v680
  %746 = vst.msk [vmem:[%s3 + $0x68] sm:$0xff] %vm732, %v681
  %747 = vst.msk [vmem:[%s3 + $0x70] sm:$0xff] %vm732, %v682
  %748 = vst.msk [vmem:[%s3 + $0x78] sm:$0xff] %vm732, %v683
  %749 = vst.msk [vmem:[%s3 + $0x80] sm:$0xff] %vm732, %v684
  %750 = vst.msk [vmem:[%s3 + $0x88] sm:$0xff] %vm732, %v685
  %751 = vst.msk [vmem:[%s3 + $0x90] sm:$0xff] %vm732, %v686
  %752 = vst.msk [vmem:[%s3 + $0x98] sm:$0xff] %vm732, %v687
  %753 = vst.msk [vmem:[%s3 + $0xa0] sm:$0xff] %vm732, %v688
  %754 = vst.msk [vmem:[%s3 + $0xa8] sm:$0xff] %vm732, %v689
  %755 = vst.msk [vmem:[%s3 + $0xb0] sm:$0xff] %vm732, %v690
  %756 = vst.msk [vmem:[%s3 + $0xb8] sm:$0xff] %vm732, %v691
  %757 = vst.msk [vmem:[%s3 + $0xc0] sm:$0xff] %vm732, %v692
  %758 = vst.msk [vmem:[%s3 + $0xc8] sm:$0xff] %vm732, %v693
  %759 = vst.msk [vmem:[%s3 + $0xd0] sm:$0xff] %vm732, %v694
  %760 = vst.msk [vmem:[%s3 + $0xd8] sm:$0xff] %vm732, %v695
  %761 = vst.msk [vmem:[%s3 + $0xe0] sm:$0xff] %vm732, %v696
  %762 = vst.msk [vmem:[%s3 + $0xe8] sm:$0xff] %vm732, %v697
  %763 = vst.msk [vmem:[%s3 + $0xf0] sm:$0xff] %vm732, %v698
  %764 = vst.msk [vmem:[%s3 + $0xf8] sm:$0xff] %vm732, %v699
  %765 = vst.msk [vmem:[%s3 + $0x100] sm:$0xff] %vm732, %v700
  %766 = vst.msk [vmem:[%s3 + $0x108] sm:$0xff] %vm732, %v701
  %767 = vst.msk [vmem:[%s3 + $0x110] sm:$0xff] %vm732, %v702
  %768 = vst.msk [vmem:[%s3 + $0x118] sm:$0xff] %vm732, %v703
  %769 = vst.msk [vmem:[%s3 + $0x120] sm:$0xff] %vm732, %v704
  %770 = vst.msk [vmem:[%s3 + $0x128] sm:$0xff] %vm732, %v705
  %771 = vst.msk [vmem:[%s3 + $0x130] sm:$0xff] %vm732, %v706
  %772 = vst.msk [vmem:[%s3 + $0x138] sm:$0xff] %vm732, %v707
  %773 = vst.msk [vmem:[%s3 + $0x140] sm:$0xff] %vm732, %v708
  %774 = vst.msk [vmem:[%s3 + $0x148] sm:$0xff] %vm732, %v709
  %775 = vst.msk [vmem:[%s3 + $0x150] sm:$0xff] %vm732, %v710
  %776 = vst.msk [vmem:[%s3 + $0x158] sm:$0xff] %vm732, %v711
  %777 = vst.msk [vmem:[%s3 + $0x160] sm:$0xff] %vm732, %v712
  %778 = vst.msk [vmem:[%s3 + $0x168] sm:$0xff] %vm732, %v713
  %779 = vst.msk [vmem:[%s3 + $0x170] sm:$0xff] %vm732, %v714
  %780 = vst.msk [vmem:[%s3 + $0x178] sm:$0xff] %vm732, %v715
  %781 = vst.msk [vmem:[%s3 + $0x180] sm:$0xff] %vm732, %v716
  %782 = vst.msk [vmem:[%s3 + $0x188] sm:$0xff] %vm732, %v717
  %783 = vst.msk [vmem:[%s3 + $0x190] sm:$0xff] %vm732, %v718
  %784 = vst.msk [vmem:[%s3 + $0x198] sm:$0xff] %vm732, %v719
  %785 = vst.msk [vmem:[%s3 + $0x1a0] sm:$0xff] %vm732, %v720
  %786 = vst.msk [vmem:[%s3 + $0x1a8] sm:$0xff] %vm732, %v721
  %787 = vst.msk [vmem:[%s3 + $0x1b0] sm:$0xff] %vm732, %v722
  %788 = vst.msk [vmem:[%s3 + $0x1b8] sm:$0xff] %vm732, %v723
  %789 = vst.msk [vmem:[%s3 + $0x1c0] sm:$0xff] %vm732, %v724
  %790 = vst.msk [vmem:[%s3 + $0x1c8] sm:$0xff] %vm732, %v725
  %791 = vst.msk [vmem:[%s3 + $0x1d0] sm:$0xff] %vm732, %v726
  %792 = vst.msk [vmem:[%s3 + $0x1d8] sm:$0xff] %vm732, %v727
  %793 = vst.msk [vmem:[%s3 + $0x1e0] sm:$0xff] %vm732, %v728
  %794 = vst.msk [vmem:[%s3 + $0x1e8] sm:$0xff] %vm732, %v729
  %795 = vst.msk [vmem:[%s3 + $0x1f0] sm:$0xff] %vm732, %v730
  %796 = vst.msk [vmem:[%s3 + $0x1f8] sm:$0xff] %vm732, %v731
  // Predicated region
  $region14: #{tpu_custom_call.1} parent=0 // pred_check
    _
  $region15: #{tpu_custom_call.1} parent=0 // pred_check_branch
    %798 = sbr.rel (0) target = $region17
  $region16: #{tpu_custom_call.1} parent=0 // pred_region
    _
  $region17: #{tpu_custom_call.1} parent=0 // pred_fallthru
    _
  // Predicated region
  $region18: #{tpu_custom_call.1} parent=0 // pred_check
    _
  $region19: #{tpu_custom_call.1} parent=0 // pred_check_branch
    %800 = sbr.rel (0) target = $region21
  $region20: #{tpu_custom_call.1} parent=0 // pred_region
    _
  $region21: #{tpu_custom_call.1} parent=0 // pred_fallthru
    _

</llo_original>
